<compile_context>
chip_gen: v6e
topology: v6e:2x2x1
jax: 0.10.0
libtpu: 0.0.40
codegen_flags: <defaults>
</compile_context>

<pallas_src>
import functools

import jax
import jax.numpy as jnp
from jax import lax
from jax.experimental import pallas as pl
from jax.experimental.pallas import tpu as pltpu


def cbam_kernel(x_ref, w1_ref, w2_ref, kcat_ref, o_ref):
    # x_ref:    (1, C, HW)   VMEM  (NCHW-native, spatial flattened on lanes)
    # w1_ref:   (hid, C)     VMEM  (fc1 1x1-conv weight)
    # w2_ref:   (C, hid)     VMEM  (fc2 1x1-conv weight)
    # kcat_ref: (2*HW, HW)   VMEM  (7x7 conv as matmul: rows 0:HW avg, HW: max)
    # o_ref:    (1, C, HW)   VMEM
    _, C, HW = x_ref.shape
    x = x_ref[0]                                             # (C, HW) f32

    # ---------------- channel attention ----------------
    inv_hw = 1.0 / HW
    avg_col = jnp.sum(x, axis=1, keepdims=True) * inv_hw     # (C, 1) lane reduce
    max_col = jnp.max(x, axis=1, keepdims=True)              # (C, 1)

    w1 = w1_ref[...]                                         # (hid, C)
    w2 = w2_ref[...]                                         # (C, hid)
    h = (jnp.maximum(jnp.dot(w1, avg_col,
                             preferred_element_type=jnp.float32), 0.0)
         + jnp.maximum(jnp.dot(w1, max_col,
                               preferred_element_type=jnp.float32), 0.0))
    # fc2 is linear, so fc2(h_avg) + fc2(h_max) == fc2(h_avg + h_max).
    ch_att = jax.nn.sigmoid(
        jnp.dot(w2, h, preferred_element_type=jnp.float32))  # (C, 1)
    xc = x * ch_att                                          # (C, HW) sublane bcast

    # ---------------- spatial attention ----------------
    inv_c = 1.0 / C
    avg_sp = jnp.sum(xc, axis=0, keepdims=True) * inv_c      # (1, HW) sublane reduce
    max_sp = jnp.max(xc, axis=0, keepdims=True)              # (1, HW)

    # 7x7 "same" conv on [avg; max] == one matmul against the fused band matrix.
    # HW is a multiple of 128, so the lane concat is layout-free.
    sp_cat = jnp.concatenate([avg_sp, max_sp], axis=1)       # (1, 2*HW)
    conv = jnp.dot(sp_cat, kcat_ref[...],
                   preferred_element_type=jnp.float32)       # (1, HW)
    sp_att = jax.nn.sigmoid(conv)

    o_ref[0] = (xc * sp_att).astype(o_ref.dtype)             # lane-dense store


@functools.partial(jax.jit, static_argnames=("reduction",))
def cbam_pallas(x_nchw, w1, w2, wconv, *, reduction=16):
    """x_nchw: (B, C, H, W) f32; w1: (C//r, C); w2: (C, C//r); wconv: (1,2,7,7)."""
    B, C, H, W = x_nchw.shape
    hid = w1.shape[0]
    HW = H * W

    # Free metadata reshape (NCHW is already contiguous in this order).
    x_flat = x_nchw.reshape(B, C, HW)

    # ---- batch-invariant precompute: 7x7 conv as a fused (2*HW, HW) matmul ----
    # K_c[i*W + j, y*W + x] = wconv[0, c, i - y + 3, j - x + 3]  (zero outside)
    dy = jnp.arange(H)[:, None] - jnp.arange(H)[None, :] + 3   # (H, H)
    dx = jnp.arange(W)[:, None] - jnp.arange(W)[None, :] + 3   # (W, W)
    vy = (dy >= 0) & (dy < 7)
    vx = (dx >= 0) & (dx < 7)
    dyc = jnp.clip(dy, 0, 6)
    dxc = jnp.clip(dx, 0, 6)
    wc = wconv[0]                                              # (2, 7, 7)
    kfull = wc[:, dyc[:, None, :, None], dxc[None, :, None, :]]  # (2, H, W, H, W)
    kfull = jnp.where((vy[:, None, :, None] & vx[None, :, None, :])[None],
                      kfull, 0.0)
    k_cat = kfull.reshape(2 * HW, HW).astype(jnp.float32)      # [K_avg; K_max]

    out_flat = pl.pallas_call(
        cbam_kernel,
        out_shape=jax.ShapeDtypeStruct((B, C, HW), jnp.float32),
        grid=(B,),
        in_specs=[
            pl.BlockSpec((1, C, HW), lambda b: (b, 0, 0)),
            pl.BlockSpec((hid, C), lambda b: (0, 0)),
            pl.BlockSpec((C, hid), lambda b: (0, 0)),
            pl.BlockSpec((2 * HW, HW), lambda b: (0, 0)),
        ],
        out_specs=pl.BlockSpec((1, C, HW), lambda b: (b, 0, 0)),
        compiler_params=pltpu.CompilerParams(
            dimension_semantics=("parallel",)),
    )(x_flat, w1, w2, k_cat)

    return out_flat.reshape(B, C, H, W)


def cbam_reference(x, w1, w2, wconv):
    """Pure-JAX reference mirroring the PyTorch CBAM forward (NCHW)."""
    avg = jnp.mean(x, axis=(2, 3), keepdims=True)          # (B, C, 1, 1)
    mx = jnp.max(x, axis=(2, 3), keepdims=True)

    def mlp(p):
        h = jnp.maximum(jnp.einsum("bchw,oc->bohw", p, w1), 0.0)
        return jnp.einsum("bohw,co->bchw", h, w2)

    ch_att = jax.nn.sigmoid(mlp(avg) + mlp(mx))
    x = x * ch_att
    avg_sp = jnp.mean(x, axis=1, keepdims=True)
    max_sp = jnp.max(x, axis=1, keepdims=True)
    sp_in = jnp.concatenate([avg_sp, max_sp], axis=1)       # (B, 2, H, W)
    conv = lax.conv_general_dilated(
        sp_in, wconv, window_strides=(1, 1), padding=((3, 3), (3, 3)),
        dimension_numbers=("NCHW", "OIHW", "NCHW"))
    sp_att = jax.nn.sigmoid(conv)
    return x * sp_att


if __name__ == "__main__":
    B, C, H, W = 2, 32, 16, 16
    reduction = 16
    hid = C // reduction

    key = jax.random.PRNGKey(0)
    kx, k1, k2, k3 = jax.random.split(key, 4)
    x = jax.random.normal(kx, (B, C, H, W), dtype=jnp.float32)
    w1 = jax.random.normal(k1, (hid, C), dtype=jnp.float32) * 0.2   # fc1 (1x1 conv)
    w2 = jax.random.normal(k2, (C, hid), dtype=jnp.float32) * 0.2   # fc2 (1x1 conv)
    wconv = jax.random.normal(k3, (1, 2, 7, 7), dtype=jnp.float32) * 0.1

    out = jax.block_until_ready(cbam_pallas(x, w1, w2, wconv, reduction=reduction))
    ref = jax.block_until_ready(cbam_reference(x, w1, w2, wconv))

    assert out.shape == (B, C, H, W)
    assert jnp.allclose(out, ref, atol=1e-3, rtol=1e-3), (
        float(jnp.max(jnp.abs(out - ref))))

    print("KERNEL_OK")
</pallas_src>

<mosaic_0001>
module attributes {stable_mosaic.version = 11 : i64} {
  func.func @cbam_kernel(%arg0: i32, %arg1: memref<1x32x256xf32, #tpu.memory_space<vmem>>, %arg2: memref<2x32xf32, #tpu.memory_space<vmem>>, %arg3: memref<32x2xf32, #tpu.memory_space<vmem>>, %arg4: memref<512x256xf32, #tpu.memory_space<vmem>>, %arg5: memref<1x32x256xf32, #tpu.memory_space<vmem>>) attributes {dimension_semantics = [#tpu.dimension_semantics<parallel>], iteration_bounds = array<i64: 2>, scalar_prefetch = 0 : i64, scratch_operands = 0 : i64, tpu.core_type = #tpu.core_type<tc>, window_params = [{transform_indices = @transform_0, window_bounds = array<i64: 1, 32, 256>}, {pipeline_mode = #tpu.pipeline_mode<synchronous>, transform_indices = @transform_1, window_bounds = array<i64: 2, 32>}, {pipeline_mode = #tpu.pipeline_mode<synchronous>, transform_indices = @transform_2, window_bounds = array<i64: 32, 2>}, {pipeline_mode = #tpu.pipeline_mode<synchronous>, transform_indices = @transform_3, window_bounds = array<i64: 512, 256>}, {transform_indices = @transform_4, window_bounds = array<i64: 1, 32, 256>}]} {
    %c0 = arith.constant 0 : index
    %c0_0 = arith.constant 0 : index
    %c0_1 = arith.constant 0 : index
    %0 = vector.load %arg1[%c0, %c0_0, %c0_1] : memref<1x32x256xf32, #tpu.memory_space<vmem>>, vector<1x32x256xf32>
    %1 = vector.shape_cast %0 : vector<1x32x256xf32> to vector<32x256xf32>
    %cst = arith.constant dense<0.000000e+00> : vector<32xf32>
    %2 = vector.multi_reduction <add>, %1, %cst [1] : vector<32x256xf32> to vector<32xf32>
    %3 = vector.shape_cast %2 : vector<32xf32> to vector<32x1xf32>
    %cst_2 = arith.constant 3.906250e-03 : f32
    %4 = vector.broadcast %cst_2 : f32 to vector<32x1xf32>
    %5 = arith.mulf %3, %4 : vector<32x1xf32>
    %cst_3 = arith.constant dense<0xFF800000> : vector<32xf32>
    %6 = vector.multi_reduction <maximumf>, %1, %cst_3 [1] : vector<32x256xf32> to vector<32xf32>
    %7 = vector.shape_cast %6 : vector<32xf32> to vector<32x1xf32>
    %c0_4 = arith.constant 0 : index
    %c0_5 = arith.constant 0 : index
    %8 = vector.load %arg2[%c0_4, %c0_5] : memref<2x32xf32, #tpu.memory_space<vmem>>, vector<2x32xf32>
    %c0_6 = arith.constant 0 : index
    %c0_7 = arith.constant 0 : index
    %9 = vector.load %arg3[%c0_6, %c0_7] : memref<32x2xf32, #tpu.memory_space<vmem>>, vector<32x2xf32>
    %cst_8 = arith.constant dense<0.000000e+00> : vector<2x1xf32>
    %10 = tpu.matmul %8, %5, %cst_8 {dimension_numbers = #tpu.dot_dimension_numbers<[1], [0], [0], [1], [0, 0, 1, 1], [], []>} : vector<2x32xf32>, vector<32x1xf32>, vector<2x1xf32> -> vector<2x1xf32>
    %cst_9 = arith.constant 0.000000e+00 : f32
    %11 = vector.broadcast %cst_9 : f32 to vector<2x1xf32>
    %12 = arith.maximumf %10, %11 : vector<2x1xf32>
    %cst_10 = arith.constant dense<0.000000e+00> : vector<2x1xf32>
    %13 = tpu.matmul %8, %7, %cst_10 {dimension_numbers = #tpu.dot_dimension_numbers<[1], [0], [0], [1], [0, 0, 1, 1], [], []>} : vector<2x32xf32>, vector<32x1xf32>, vector<2x1xf32> -> vector<2x1xf32>
    %cst_11 = arith.constant 0.000000e+00 : f32
    %14 = vector.broadcast %cst_11 : f32 to vector<2x1xf32>
    %15 = arith.maximumf %13, %14 : vector<2x1xf32>
    %16 = arith.addf %12, %15 : vector<2x1xf32>
    %cst_12 = arith.constant dense<0.000000e+00> : vector<32x1xf32>
    %17 = tpu.matmul %9, %16, %cst_12 {dimension_numbers = #tpu.dot_dimension_numbers<[1], [0], [0], [1], [0, 0, 1, 1], [], []>} : vector<32x2xf32>, vector<2x1xf32>, vector<32x1xf32> -> vector<32x1xf32>
    %18 = arith.negf %17 : vector<32x1xf32>
    %19 = math.exp %18 : vector<32x1xf32>
    %cst_13 = arith.constant 1.000000e+00 : f32
    %20 = vector.broadcast %cst_13 : f32 to vector<32x1xf32>
    %21 = arith.addf %20, %19 : vector<32x1xf32>
    %22 = arith.divf %20, %21 : vector<32x1xf32>
    %23 = vector.broadcast %22 : vector<32x1xf32> to vector<32x256xf32>
    %24 = arith.mulf %1, %23 : vector<32x256xf32>
    %cst_14 = arith.constant dense<0.000000e+00> : vector<256xf32>
    %25 = vector.multi_reduction <add>, %24, %cst_14 [0] : vector<32x256xf32> to vector<256xf32>
    %26 = vector.shape_cast %25 : vector<256xf32> to vector<1x256xf32>
    %cst_15 = arith.constant 3.125000e-02 : f32
    %27 = vector.broadcast %cst_15 : f32 to vector<1x256xf32>
    %28 = arith.mulf %26, %27 : vector<1x256xf32>
    %cst_16 = arith.constant dense<0xFF800000> : vector<256xf32>
    %29 = vector.multi_reduction <maximumf>, %24, %cst_16 [0] : vector<32x256xf32> to vector<256xf32>
    %30 = vector.shape_cast %29 : vector<256xf32> to vector<1x256xf32>
    %31 = tpu.concatenate %28, %30 in 1 : vector<1x256xf32>, vector<1x256xf32> -> vector<1x512xf32>
    %c0_17 = arith.constant 0 : index
    %c0_18 = arith.constant 0 : index
    %32 = vector.load %arg4[%c0_17, %c0_18] : memref<512x256xf32, #tpu.memory_space<vmem>>, vector<512x256xf32>
    %cst_19 = arith.constant dense<0.000000e+00> : vector<1x256xf32>
    %33 = tpu.matmul %31, %32, %cst_19 {dimension_numbers = #tpu.dot_dimension_numbers<[1], [0], [0], [1], [0, 0, 1, 1], [], []>} : vector<1x512xf32>, vector<512x256xf32>, vector<1x256xf32> -> vector<1x256xf32>
    %34 = arith.negf %33 : vector<1x256xf32>
    %35 = math.exp %34 : vector<1x256xf32>
    %cst_20 = arith.constant 1.000000e+00 : f32
    %36 = vector.broadcast %cst_20 : f32 to vector<1x256xf32>
    %37 = arith.addf %36, %35 : vector<1x256xf32>
    %38 = arith.divf %36, %37 : vector<1x256xf32>
    %39 = vector.broadcast %38 : vector<1x256xf32> to vector<32x256xf32>
    %40 = arith.mulf %24, %39 : vector<32x256xf32>
    %c0_21 = arith.constant 0 : index
    %c0_22 = arith.constant 0 : index
    %c0_23 = arith.constant 0 : index
    %41 = vector.load %arg5[%c0_21, %c0_22, %c0_23] : memref<1x32x256xf32, #tpu.memory_space<vmem>>, vector<1x32x256xf32>
    %42 = vector.shape_cast %41 : vector<1x32x256xf32> to vector<32x256xf32>
    %43 = vector.shape_cast %40 : vector<32x256xf32> to vector<1x32x256xf32>
    tpu.vector_store %arg5[%c0_21, %c0_22, %c0_23], %43 {strides = array<i32>} : memref<1x32x256xf32, #tpu.memory_space<vmem>>, vector<1x32x256xf32>,
    return
  }
  func.func @transform_0(%arg0: i32) -> (i32, i32, i32) {
    %c0_i32 = arith.constant 0 : i32
    %c0_i32_0 = arith.constant 0 : i32
    %c0_i32_1 = arith.constant 0 : i32
    return %arg0, %c0_i32, %c0_i32_0 : i32, i32, i32
  }
  func.func @transform_1(%arg0: i32) -> (i32, i32) {
    %c0_i32 = arith.constant 0 : i32
    %c0_i32_0 = arith.constant 0 : i32
    %c0_i32_1 = arith.constant 0 : i32
    return %c0_i32, %c0_i32_0 : i32, i32
  }
  func.func @transform_2(%arg0: i32) -> (i32, i32) {
    %c0_i32 = arith.constant 0 : i32
    %c0_i32_0 = arith.constant 0 : i32
    %c0_i32_1 = arith.constant 0 : i32
    return %c0_i32, %c0_i32_0 : i32, i32
  }
  func.func @transform_3(%arg0: i32) -> (i32, i32) {
    %c0_i32 = arith.constant 0 : i32
    %c0_i32_0 = arith.constant 0 : i32
    %c0_i32_1 = arith.constant 0 : i32
    return %c0_i32, %c0_i32_0 : i32, i32
  }
  func.func @transform_4(%arg0: i32) -> (i32, i32, i32) {
    %c0_i32 = arith.constant 0 : i32
    %c0_i32_0 = arith.constant 0 : i32
    %c0_i32_1 = arith.constant 0 : i32
    return %arg0, %c0_i32, %c0_i32_0 : i32, i32, i32
  }
}

</mosaic_0001>

<llo_original>
// kernel: cbam_pallas.1
$region0: #{cbam_pallas.1}
  #allocation0 [shape = 'u32[]', space=smem, size = 0x4, offset = 0x4, fixed_abs, tag = 'smem constant byte address 0x4 - core index']
  #allocation1 [shape = 'u32[144,128]{1,0:T(1,128)}', space=vmem, size = 0x12000, scoped, tag = 'internal scratch']
  %s0 = inlined_call_operand.vmem [shape: f32[2,32,256], index: 0, kind: input, shape index: {}]
  %s1 = inlined_call_operand.vmem [shape: f32[2,32], index: 1, kind: input, shape index: {}]
  %s2 = inlined_call_operand.vmem [shape: f32[32,2], index: 2, kind: input, shape index: {}]
  %s3 = inlined_call_operand.vmem [shape: f32[512,256], index: 3, kind: input, shape index: {}]
  %s4 = inlined_call_operand.vmem [shape: f32[2,32,256], index: 4, kind: output, shape index: {}]
  %s5 = sld [smem:[#allocation0]]
  $region49: #{cbam_pallas.1} parent=0
    _
  %s7 = ssub.s32 1, %s5
  %s8 = scalar_select 0, %s7, %s5
  loop: start=0, step=1, limit=4
  $region2: #{cbam_pallas.1} parent=0 // loop_pre_header
    _
  $region3: #{cbam_pallas.1} parent=0 // loop_header
    %s10 = sphi 0, %s14
    %p11 = scmp.ge.s32.totalorder %s10, 4
    %s20 = sphi 0, %s22
    %s23 = sphi 0, %s20
    %s24 = sphi 0, %s23
    %s40 = sphi 0, %s24
    %s44 = sphi 0, %s44
    %s46 = sphi 0, %s44
    %s47 = sphi 0, %s46
    %s61 = sphi 0, %s47
    %s65 = sphi 0, %s65
    %s67 = sphi 0, %s65
    %s68 = sphi 0, %s67
    %s82 = sphi 0, %s68
    %s86 = sphi 0, %s86
    %s88 = sphi 0, %s86
    %s89 = sphi 0, %s88
    %s103 = sphi 0, %s89
    %s109 = sphi 0, %s111
    %s112 = sphi 0, %s109
    %s113 = sphi 0, %s112
    %s129 = sphi 0, %s113
  $region4: #{cbam_pallas.1} parent=0 // loop_header_branch
    %13 = sbr.rel (%p11) target = $region8
  $region5: #{cbam_pallas.1} parent=0 // loop_body
    %s15 = ssub.s32 %s10, 1
    %s16 = ssub.s32 %s10, 2
    %s17 = sadd.s32 %s10, 1
    %s18 = ssub.s32 %s10, %s17
    %p19 = scmp.eq.s32.totalorder %s18, 0
    %s21 = sadd.s32 %s20, 1
    %s22 = scalar_select %p19, %s20, %s21
    %p25 = pneg %p19
    %p26 = scmp.eq.s32.totalorder %s10, 1
    %p27 = por %p25, %p26
    %p28 = scmp.ne.s32.totalorder %s20, %s23
    %p29 = scmp.eq.s32.totalorder %s10, 0
    %p30 = por %p28, %p29
    %p31 = scmp.ne.s32.totalorder %s20, %s23
    %p32 = scmp.eq.s32.totalorder %s15, 1
    %p33 = por %p31, %p32
    %p34 = scmp.ne.s32.totalorder %s23, %s24
    %p35 = scmp.eq.s32.totalorder %s15, 0
    %p36 = por %p34, %p35
    %p37 = scmp.ne.s32.totalorder %s23, %s24
    %p38 = scmp.eq.s32.totalorder %s16, 1
    %p39 = por %p37, %p38
    %p41 = scmp.ne.s32.totalorder %s24, %s40
    %p42 = scmp.eq.s32.totalorder %s16, 0
    %p43 = por %p41, %p42
    %s45 = sadd.s32 %s44, 1
    %p48 = scmp.eq.s32.totalorder %s10, 1
    %p49 = scmp.ne.s32.totalorder %s44, %s46
    %p50 = scmp.eq.s32.totalorder %s10, 0
    %p51 = por %p49, %p50
    %p52 = scmp.ne.s32.totalorder %s44, %s46
    %p53 = scmp.eq.s32.totalorder %s15, 1
    %p54 = por %p52, %p53
    %p55 = scmp.ne.s32.totalorder %s46, %s47
    %p56 = scmp.eq.s32.totalorder %s15, 0
    %p57 = por %p55, %p56
    %p58 = scmp.ne.s32.totalorder %s46, %s47
    %p59 = scmp.eq.s32.totalorder %s16, 1
    %p60 = por %p58, %p59
    %p62 = scmp.ne.s32.totalorder %s47, %s61
    %p63 = scmp.eq.s32.totalorder %s16, 0
    %p64 = por %p62, %p63
    %s66 = sadd.s32 %s65, 1
    %p69 = scmp.eq.s32.totalorder %s10, 1
    %p70 = scmp.ne.s32.totalorder %s65, %s67
    %p71 = scmp.eq.s32.totalorder %s10, 0
    %p72 = por %p70, %p71
    %p73 = scmp.ne.s32.totalorder %s65, %s67
    %p74 = scmp.eq.s32.totalorder %s15, 1
    %p75 = por %p73, %p74
    %p76 = scmp.ne.s32.totalorder %s67, %s68
    %p77 = scmp.eq.s32.totalorder %s15, 0
    %p78 = por %p76, %p77
    %p79 = scmp.ne.s32.totalorder %s67, %s68
    %p80 = scmp.eq.s32.totalorder %s16, 1
    %p81 = por %p79, %p80
    %p83 = scmp.ne.s32.totalorder %s68, %s82
    %p84 = scmp.eq.s32.totalorder %s16, 0
    %p85 = por %p83, %p84
    %s87 = sadd.s32 %s86, 1
    %p90 = scmp.eq.s32.totalorder %s10, 1
    %p91 = scmp.ne.s32.totalorder %s86, %s88
    %p92 = scmp.eq.s32.totalorder %s10, 0
    %p93 = por %p91, %p92
    %p94 = scmp.ne.s32.totalorder %s86, %s88
    %p95 = scmp.eq.s32.totalorder %s15, 1
    %p96 = por %p94, %p95
    %p97 = scmp.ne.s32.totalorder %s88, %s89
    %p98 = scmp.eq.s32.totalorder %s15, 0
    %p99 = por %p97, %p98
    %p100 = scmp.ne.s32.totalorder %s88, %s89
    %p101 = scmp.eq.s32.totalorder %s16, 1
    %p102 = por %p100, %p101
    %p104 = scmp.ne.s32.totalorder %s89, %s103
    %p105 = scmp.eq.s32.totalorder %s16, 0
    %p106 = por %p104, %p105
    %s107 = ssub.s32 %s10, %s17
    %p108 = scmp.eq.s32.totalorder %s107, 0
    %s110 = sadd.s32 %s109, 1
    %s111 = scalar_select %p108, %s109, %s110
    %p114 = pneg %p108
    %p115 = scmp.eq.s32.totalorder %s10, 1
    %p116 = por %p114, %p115
    %p117 = scmp.ne.s32.totalorder %s109, %s112
    %p118 = scmp.eq.s32.totalorder %s10, 0
    %p119 = por %p117, %p118
    %p120 = scmp.ne.s32.totalorder %s109, %s112
    %p121 = scmp.eq.s32.totalorder %s15, 1
    %p122 = por %p120, %p121
    %p123 = scmp.ne.s32.totalorder %s112, %s113
    %p124 = scmp.eq.s32.totalorder %s15, 0
    %p125 = por %p123, %p124
    %p126 = scmp.ne.s32.totalorder %s112, %s113
    %p127 = scmp.eq.s32.totalorder %s16, 1
    %p128 = por %p126, %p127
    %p130 = scmp.ne.s32.totalorder %s113, %s129
    %p131 = scmp.eq.s32.totalorder %s16, 0
    %p132 = por %p130, %p131
    %p133 = scmp.le.s32.totalorder 1, %s10
    %p134 = scmp.lt.s32.totalorder %s10, 3
    %p135 = pnand %p133, %p134
    %p136 = pneg %p135
    // Predicated region
    $region9: #{cbam_pallas.1} parent=5 // pred_check
      _
    $region10: #{cbam_pallas.1} parent=5 // pred_check_branch
      %138 = sbr.rel (%p135) target = $region12
    $region11: #{cbam_pallas.1} parent=5 // pred_region
      %s139 = ssub.s32 %s10, 1
      // Predicated region
      $region13: #{cbam_pallas.1} parent=11 // pred_check
        %p140 = pneg %p57
      $region14: #{cbam_pallas.1} parent=11 // pred_check_branch
        %142 = sbr.rel (%p140) target = $region16
      $region15: #{cbam_pallas.1} parent=11 // pred_region
        _
      $region16: #{cbam_pallas.1} parent=11 // pred_fallthru
        _
      // Predicated region
      $region17: #{cbam_pallas.1} parent=11 // pred_check
        %p143 = pneg %p78
      $region18: #{cbam_pallas.1} parent=11 // pred_check_branch
        %145 = sbr.rel (%p143) target = $region20
      $region19: #{cbam_pallas.1} parent=11 // pred_region
        _
      $region20: #{cbam_pallas.1} parent=11 // pred_fallthru
        _
      // Predicated region
      $region21: #{cbam_pallas.1} parent=11 // pred_check
        %p146 = pneg %p99
      $region22: #{cbam_pallas.1} parent=11 // pred_check_branch
        %148 = sbr.rel (%p146) target = $region24
      $region23: #{cbam_pallas.1} parent=11 // pred_region
        _
      $region24: #{cbam_pallas.1} parent=11 // pred_fallthru
        _
    $region12: #{cbam_pallas.1} parent=5 // pred_fallthru
      _
    %p149 = scmp.lt.s32.totalorder %s10, 2
    // Predicated region
    $region25: #{cbam_pallas.1} parent=5 // pred_check
      %p150 = pneg %p149
    $region26: #{cbam_pallas.1} parent=5 // pred_check_branch
      %152 = sbr.rel (%p150) target = $region28
    $region27: #{cbam_pallas.1} parent=5 // pred_region
      // Predicated region
      $region29: #{cbam_pallas.1} parent=27 // pred_check
        %p153 = pneg %p30
      $region30: #{cbam_pallas.1} parent=27 // pred_check_branch
        %155 = sbr.rel (%p153) target = $region32
      $region31: #{cbam_pallas.1} parent=27 // pred_region
        %p156 = scmp.lt.s32.totalorder %s10, 1
        %s157 = scalar_select %p156, %s10, 1
        %s158 = smul.addr %s157, 8
        %s159 = smul.addr %s158, 8
        %s160 = scalar_lea.vmem %s0, %s159
      $region32: #{cbam_pallas.1} parent=27 // pred_fallthru
        _
    $region28: #{cbam_pallas.1} parent=5 // pred_fallthru
      _
    %p161 = scmp.le.s32.totalorder 1, %s10
    %p162 = scmp.lt.s32.totalorder %s10, 3
    %p163 = pnand %p161, %p162
    %p164 = pneg %p163
    // Predicated region
    $region33: #{cbam_pallas.1} parent=5 // pred_check
      _
    $region34: #{cbam_pallas.1} parent=5 // pred_check_branch
      %166 = sbr.rel (%p163) target = $region36
    $region35: #{cbam_pallas.1} parent=5 // pred_region
      %s167 = ssub.s32 %s10, 1
      %p168 = scmp.lt.s32.totalorder %s15, 1
      %s169 = scalar_select %p168, %s15, 1
      %s170 = smul.addr %s169, 8
      %s171 = smul.addr %s170, 8
      %s172 = scalar_lea.vmem %s0, %s171
      %p173 = pneg %p36
      %p174 = pneg %p33
      %p175 = pneg %p57
      %p176 = pneg %p54
      %p177 = pneg %p78
      %p178 = pneg %p75
      %p179 = pneg %p99
      %p180 = pneg %p96
      %p181 = pneg %p125
      %p182 = pneg %p122
      %p183 = scmp.lt.s32.totalorder %s15, 1
      %s184 = scalar_select %p183, %s15, 1
      %s185 = smul.addr %s184, 8
      %s186 = smul.addr %s185, 8
      %s187 = scalar_lea.vmem %s4, %s186
      %p188 = scmp.lt.s32.totalorder %s15, 1
      %s189 = scalar_select %p188, %s15, 1
      %s190 = smul.addr %s189, 8
      %s191 = smul.addr %s190, 8
      %s192 = scalar_lea.vmem %s0, %s191
      %p193 = scmp.lt.s32.totalorder %s15, 1
      %s194 = scalar_select %p193, %s15, 1
      %s195 = smul.addr %s194, 8
      %s196 = smul.addr %s195, 8
      %s197 = scalar_lea.vmem %s4, %s196
      %v198 = vld [vmem:[%s192] sm:$0xff]
      %v199 = vld [vmem:[%s192 + $0x8] sm:$0xff]
      %v200 = vld [vmem:[%s192 + $0x10] sm:$0xff]
      %v201 = vld [vmem:[%s192 + $0x18] sm:$0xff]
      %v202 = vld [vmem:[%s192 + $0x20] sm:$0xff]
      %v203 = vld [vmem:[%s192 + $0x28] sm:$0xff]
      %v204 = vld [vmem:[%s192 + $0x30] sm:$0xff]
      %v205 = vld [vmem:[%s192 + $0x38] sm:$0xff]
      %v206 = vadd.f32 %v198, %v199
      %207 = vadd.xlane.f32.xlu0 %v206
      %v208 = vpop.xlane.xlu0 %207
      %v209 = vadd.f32 %v200, %v201
      %210 = vadd.xlane.f32.xlu0 %v209
      %v211 = vpop.xlane.xlu0 %210
      %v212 = vadd.f32 %v202, %v203
      %213 = vadd.xlane.f32.xlu0 %v212
      %v214 = vpop.xlane.xlu0 %213
      %v215 = vadd.f32 %v204, %v205
      %216 = vadd.xlane.f32.xlu0 %v215
      %v217 = vpop.xlane.xlu0 %216
      %v218 = vmul.f32 %v208, 0.00390625
      %v219 = vmul.f32 %v211, 0.00390625
      %v220 = vmul.f32 %v214, 0.00390625
      %v221 = vmul.f32 %v217, 0.00390625
      %v222 = vmax.f32 %v198, %v199
      %223 = vmax.xlane.f32.xlu0 %v222
      %v224 = vpop.xlane.xlu0 %223
      %v225 = vmax.f32 %v200, %v201
      %226 = vmax.xlane.f32.xlu0 %v225
      %v227 = vpop.xlane.xlu0 %226
      %v228 = vmax.f32 %v202, %v203
      %229 = vmax.xlane.f32.xlu0 %v228
      %v230 = vpop.xlane.xlu0 %229
      %v231 = vmax.f32 %v204, %v205
      %232 = vmax.xlane.f32.xlu0 %v231
      %v233 = vpop.xlane.xlu0 %232
      %v234 = vld [vmem:[%s1] sm:$0x3]
      %v235 = vld [vmem:[%s2] sm:$0xff]
      %v236 = vld [vmem:[%s2 + $0x8] sm:$0xff]
      %v237 = vld [vmem:[%s2 + $0x10] sm:$0xff]
      %v238 = vld [vmem:[%s2 + $0x18] sm:$0xff]
      %vm239 = vcmask 261120
      %v241 = vsel %vm239, %v234, 0
      %243 = vmatprep.subr.mxu0 0.0
      %244 = vmatpush1.msra.mxu0 0.0
      %245 = vmatprep.subr.mxu0 0.0
      %246 = vmatpush1.msra.mxu0 0.0
      %247 = vmatprep.subr.mxu0 0.0
      %248 = vmatpush1.msra.mxu0 0.0
      %249 = vmatprep.subr.mxu0 0.0
      %250 = vmatpush1.msra.mxu0 0.0
      %251 = vmatprep.subr.mxu0 0.0
      %252 = vmatpush1.msra.mxu0 0.0
      %253 = vmatprep.subr.mxu0 0.0
      %254 = vmatpush1.msra.mxu0 0.0
      %255 = vmatprep.subr.mxu0 0.0
      %256 = vmatpush1.msra.mxu0 0.0
      %257 = vmatprep.subr.mxu0 0.0
      %258 = vmatpush1.msra.mxu0 0.0
      %259 = vmatprep.subr.mxu0 0.0
      %260 = vmatpush1.msra.mxu0 0.0
      %261 = vmatprep.subr.mxu0 0.0
      %262 = vmatpush1.msra.mxu0 0.0
      %263 = vmatprep.subr.mxu0 0.0
      %264 = vmatpush1.msra.mxu0 0.0
      %265 = vmatprep.subr.mxu0 0.0
      %266 = vmatpush1.msra.mxu0 0.0
      %267 = vmatprep.subr.mxu0 0.0
      %268 = vmatpush1.msra.mxu0 %v221
      %269 = vmatprep.subr.mxu0 0.0
      %270 = vmatpush1.msra.mxu0 %v220
      %271 = vmatprep.subr.mxu0 0.0
      %272 = vmatpush1.msra.mxu0 %v219
      %273 = vmatprep.subr.mxu0 0.0
      %274 = vmatpush1.msra.mxu0 %v218
      %275 = vmatprep.subr.mxu0 0.0
      %276 = vmatpush2.msra.mxu0 0.0
      %277 = vmatprep.subr.mxu0 0.0
      %278 = vmatpush2.msra.mxu0 0.0
      %279 = vmatprep.subr.mxu0 0.0
      %280 = vmatpush2.msra.mxu0 0.0
      %281 = vmatprep.subr.mxu0 0.0
      %282 = vmatpush2.msra.mxu0 0.0
      %283 = vmatprep.subr.mxu0 0.0
      %284 = vmatpush2.msra.mxu0 0.0
      %285 = vmatprep.subr.mxu0 0.0
      %286 = vmatpush2.msra.mxu0 0.0
      %287 = vmatprep.subr.mxu0 0.0
      %288 = vmatpush2.msra.mxu0 0.0
      %289 = vmatprep.subr.mxu0 0.0
      %290 = vmatpush2.msra.mxu0 0.0
      %291 = vmatprep.subr.mxu0 0.0
      %292 = vmatpush2.msra.mxu0 0.0
      %293 = vmatprep.subr.mxu0 0.0
      %294 = vmatpush2.msra.mxu0 0.0
      %295 = vmatprep.subr.mxu0 0.0
      %296 = vmatpush2.msra.mxu0 0.0
      %297 = vmatprep.subr.mxu0 0.0
      %298 = vmatpush2.msra.mxu0 0.0
      %299 = vmatprep.subr.mxu0 0.0
      %300 = vmatpush2.msra.mxu0 0.0
      %301 = vmatprep.subr.mxu0 0.0
      %302 = vmatpush2.msra.mxu0 0.0
      %303 = vmatprep.subr.mxu0 0.0
      %304 = vmatpush2.msra.mxu0 0.0
      %305 = vmatprep.subr.mxu0 0.0
      %306 = vmatpush2.msra.mxu0 0.0
      %307 = vmatprep.mubr.f32.mxu0 0.0
      %308 = vmatmul.mubr.f32.gmra.mxu0 %v241
      %v309 = vpop.f32.mrf.mxu0
      %v310 = vadd.f32 0.0, %v309
      %v311 = vpop.f32.mrf.mxu0
      %312 = vdwg.mxu0
      %v313 = vmax.f32 %v310, 0.0
      %314 = vmatprep.subr.mxu0 0.0
      %315 = vmatpush1.msra.mxu0 0.0
      %316 = vmatprep.subr.mxu0 0.0
      %317 = vmatpush1.msra.mxu0 0.0
      %318 = vmatprep.subr.mxu0 0.0
      %319 = vmatpush1.msra.mxu0 0.0
      %320 = vmatprep.subr.mxu0 0.0
      %321 = vmatpush1.msra.mxu0 0.0
      %322 = vmatprep.subr.mxu0 0.0
      %323 = vmatpush1.msra.mxu0 0.0
      %324 = vmatprep.subr.mxu0 0.0
      %325 = vmatpush1.msra.mxu0 0.0
      %326 = vmatprep.subr.mxu0 0.0
      %327 = vmatpush1.msra.mxu0 0.0
      %328 = vmatprep.subr.mxu0 0.0
      %329 = vmatpush1.msra.mxu0 0.0
      %330 = vmatprep.subr.mxu0 0.0
      %331 = vmatpush1.msra.mxu0 0.0
      %332 = vmatprep.subr.mxu0 0.0
      %333 = vmatpush1.msra.mxu0 0.0
      %334 = vmatprep.subr.mxu0 0.0
      %335 = vmatpush1.msra.mxu0 0.0
      %336 = vmatprep.subr.mxu0 0.0
      %337 = vmatpush1.msra.mxu0 0.0
      %338 = vmatprep.subr.mxu0 0.0
      %339 = vmatpush1.msra.mxu0 %v233
      %340 = vmatprep.subr.mxu0 0.0
      %341 = vmatpush1.msra.mxu0 %v230
      %342 = vmatprep.subr.mxu0 0.0
      %343 = vmatpush1.msra.mxu0 %v227
      %344 = vmatprep.subr.mxu0 0.0
      %345 = vmatpush1.msra.mxu0 %v224
      %346 = vmatprep.subr.mxu0 0.0
      %347 = vmatpush2.msra.mxu0 0.0
      %348 = vmatprep.subr.mxu0 0.0
      %349 = vmatpush2.msra.mxu0 0.0
      %350 = vmatprep.subr.mxu0 0.0
      %351 = vmatpush2.msra.mxu0 0.0
      %352 = vmatprep.subr.mxu0 0.0
      %353 = vmatpush2.msra.mxu0 0.0
      %354 = vmatprep.subr.mxu0 0.0
      %355 = vmatpush2.msra.mxu0 0.0
      %356 = vmatprep.subr.mxu0 0.0
      %357 = vmatpush2.msra.mxu0 0.0
      %358 = vmatprep.subr.mxu0 0.0
      %359 = vmatpush2.msra.mxu0 0.0
      %360 = vmatprep.subr.mxu0 0.0
      %361 = vmatpush2.msra.mxu0 0.0
      %362 = vmatprep.subr.mxu0 0.0
      %363 = vmatpush2.msra.mxu0 0.0
      %364 = vmatprep.subr.mxu0 0.0
      %365 = vmatpush2.msra.mxu0 0.0
      %366 = vmatprep.subr.mxu0 0.0
      %367 = vmatpush2.msra.mxu0 0.0
      %368 = vmatprep.subr.mxu0 0.0
      %369 = vmatpush2.msra.mxu0 0.0
      %370 = vmatprep.subr.mxu0 0.0
      %371 = vmatpush2.msra.mxu0 0.0
      %372 = vmatprep.subr.mxu0 0.0
      %373 = vmatpush2.msra.mxu0 0.0
      %374 = vmatprep.subr.mxu0 0.0
      %375 = vmatpush2.msra.mxu0 0.0
      %376 = vmatprep.subr.mxu0 0.0
      %377 = vmatpush2.msra.mxu0 0.0
      %378 = vmatprep.mubr.f32.mxu0 0.0
      %379 = vmatmul.mubr.f32.gmra.mxu0 %v241
      %v380 = vpop.f32.mrf.mxu0
      %v381 = vadd.f32 0.0, %v380
      %v382 = vpop.f32.mrf.mxu0
      %383 = vdwg.mxu0
      %v384 = vmax.f32 %v381, 0.0
      %v385 = vadd.f32 %v313, %v384
      %vm386 = vcmask 15360
      %v388 = vsel %vm386, %v235, 0
      %v391 = vsel %vm386, %v236, 0
      %v394 = vsel %vm386, %v237, 0
      %v397 = vsel %vm386, %v238, 0
      %vm399 = vcmask 1041408
      %v401 = vsel %vm399, %v385, 0
      %403 = vmatprep.subr.mxu0 0.0
      %404 = vmatpush1.msra.mxu0 0.0
      %405 = vmatprep.subr.mxu0 0.0
      %406 = vmatpush1.msra.mxu0 0.0
      %407 = vmatprep.subr.mxu0 0.0
      %408 = vmatpush1.msra.mxu0 0.0
      %409 = vmatprep.subr.mxu0 0.0
      %410 = vmatpush1.msra.mxu0 0.0
      %411 = vmatprep.subr.mxu0 0.0
      %412 = vmatpush1.msra.mxu0 0.0
      %413 = vmatprep.subr.mxu0 0.0
      %414 = vmatpush1.msra.mxu0 0.0
      %415 = vmatprep.subr.mxu0 0.0
      %416 = vmatpush1.msra.mxu0 0.0
      %417 = vmatprep.subr.mxu0 0.0
      %418 = vmatpush1.msra.mxu0 0.0
      %419 = vmatprep.subr.mxu0 0.0
      %420 = vmatpush1.msra.mxu0 0.0
      %421 = vmatprep.subr.mxu0 0.0
      %422 = vmatpush1.msra.mxu0 0.0
      %423 = vmatprep.subr.mxu0 0.0
      %424 = vmatpush1.msra.mxu0 0.0
      %425 = vmatprep.subr.mxu0 0.0
      %426 = vmatpush1.msra.mxu0 0.0
      %427 = vmatprep.subr.mxu0 0.0
      %428 = vmatpush1.msra.mxu0 0.0
      %429 = vmatprep.subr.mxu0 0.0
      %430 = vmatpush1.msra.mxu0 0.0
      %431 = vmatprep.subr.mxu0 0.0
      %432 = vmatpush1.msra.mxu0 0.0
      %433 = vmatprep.subr.mxu0 0.0
      %434 = vmatpush1.msra.mxu0 %v401
      %435 = vmatprep.subr.mxu0 0.0
      %436 = vmatpush2.msra.mxu0 0.0
      %437 = vmatprep.subr.mxu0 0.0
      %438 = vmatpush2.msra.mxu0 0.0
      %439 = vmatprep.subr.mxu0 0.0
      %440 = vmatpush2.msra.mxu0 0.0
      %441 = vmatprep.subr.mxu0 0.0
      %442 = vmatpush2.msra.mxu0 0.0
      %443 = vmatprep.subr.mxu0 0.0
      %444 = vmatpush2.msra.mxu0 0.0
      %445 = vmatprep.subr.mxu0 0.0
      %446 = vmatpush2.msra.mxu0 0.0
      %447 = vmatprep.subr.mxu0 0.0
      %448 = vmatpush2.msra.mxu0 0.0
      %449 = vmatprep.subr.mxu0 0.0
      %450 = vmatpush2.msra.mxu0 0.0
      %451 = vmatprep.subr.mxu0 0.0
      %452 = vmatpush2.msra.mxu0 0.0
      %453 = vmatprep.subr.mxu0 0.0
      %454 = vmatpush2.msra.mxu0 0.0
      %455 = vmatprep.subr.mxu0 0.0
      %456 = vmatpush2.msra.mxu0 0.0
      %457 = vmatprep.subr.mxu0 0.0
      %458 = vmatpush2.msra.mxu0 0.0
      %459 = vmatprep.subr.mxu0 0.0
      %460 = vmatpush2.msra.mxu0 0.0
      %461 = vmatprep.subr.mxu0 0.0
      %462 = vmatpush2.msra.mxu0 0.0
      %463 = vmatprep.subr.mxu0 0.0
      %464 = vmatpush2.msra.mxu0 0.0
      %465 = vmatprep.subr.mxu0 0.0
      %466 = vmatpush2.msra.mxu0 0.0
      %467 = vmatprep.mubr.f32.mxu0 0.0
      %468 = vmatmul.mubr.f32.gmra.mxu0 %v388
      %v469 = vpop.f32.mrf.mxu0
      %v470 = vadd.f32 0.0, %v469
      %v471 = vpop.f32.mrf.mxu0
      %472 = vmatprep.mubr.f32.mxu0 0.0
      %473 = vmatmul.mubr.f32.gmra.mxu0 %v391
      %v474 = vpop.f32.mrf.mxu0
      %v475 = vadd.f32 0.0, %v474
      %v476 = vpop.f32.mrf.mxu0
      %477 = vmatprep.mubr.f32.mxu0 0.0
      %478 = vmatmul.mubr.f32.gmra.mxu0 %v394
      %v479 = vpop.f32.mrf.mxu0
      %v480 = vadd.f32 0.0, %v479
      %v481 = vpop.f32.mrf.mxu0
      %482 = vmatprep.mubr.f32.mxu0 0.0
      %483 = vmatmul.mubr.f32.gmra.mxu0 %v397
      %v484 = vpop.f32.mrf.mxu0
      %v485 = vadd.f32 0.0, %v484
      %v486 = vpop.f32.mrf.mxu0
      %487 = vdwg.mxu0
      %v488 = vxor.u32 %v470, 2147483648
      %v489 = vxor.u32 %v475, 2147483648
      %v490 = vxor.u32 %v480, 2147483648
      %v491 = vxor.u32 %v485, 2147483648
      %v492 = vmul.f32 %v488, 1.442695
      %v493 = vpow.pop %v492
      %v494 = vmul.f32 %v489, 1.442695
      %v495 = vpow.pop %v494
      %v496 = vmul.f32 %v490, 1.442695
      %v497 = vpow.pop %v496
      %v498 = vmul.f32 %v491, 1.442695
      %v499 = vpow.pop %v498
      %v500 = vadd.f32 %v493, 1.0
      %v501 = vadd.f32 %v495, 1.0
      %v502 = vadd.f32 %v497, 1.0
      %v503 = vadd.f32 %v499, 1.0
      %v504 = vrcp.pop %v500
      %v505 = vmul.f32 1.0, %v504
      %v506 = vrcp.pop %v501
      %v507 = vmul.f32 1.0, %v506
      %v508 = vrcp.pop %v502
      %v509 = vmul.f32 1.0, %v508
      %v510 = vrcp.pop %v503
      %v511 = vmul.f32 1.0, %v510
      %513 = vset.pattern.permute.xlu0 0
      %514 = vperm.xlu0 %513, %v505
      %v515 = vpop.permute.xlu0 %514
      %518 = vset.pattern.permute.xlu0 0
      %519 = vperm.xlu0 %518, %v507
      %v520 = vpop.permute.xlu0 %519
      %523 = vset.pattern.permute.xlu0 0
      %524 = vperm.xlu0 %523, %v509
      %v525 = vpop.permute.xlu0 %524
      %528 = vset.pattern.permute.xlu0 0
      %529 = vperm.xlu0 %528, %v511
      %v530 = vpop.permute.xlu0 %529
      %v532 = vmul.f32 %v198, %v515
      %v533 = vmul.f32 %v199, %v515
      %v534 = vmul.f32 %v200, %v520
      %v535 = vmul.f32 %v201, %v520
      %v536 = vmul.f32 %v202, %v525
      %v537 = vmul.f32 %v203, %v525
      %v538 = vmul.f32 %v204, %v530
      %v539 = vmul.f32 %v205, %v530
      %v540 = vadd.f32 %v532, %v534
      %v541 = vadd.f32 %v540, %v536
      %v542 = vadd.f32 %v541, %v538
      %v543 = vrot.slane %v542, 4
      %v544 = vadd.f32 %v542, %v543
      %v545 = vrot.slane %v544, 2
      %v546 = vadd.f32 %v544, %v545
      %v547 = vrot.slane %v546, 1
      %v548 = vadd.f32 %v546, %v547
      %v549 = vadd.f32 %v533, %v535
      %v550 = vadd.f32 %v549, %v537
      %v551 = vadd.f32 %v550, %v539
      %v552 = vrot.slane %v551, 4
      %v553 = vadd.f32 %v551, %v552
      %v554 = vrot.slane %v553, 2
      %v555 = vadd.f32 %v553, %v554
      %v556 = vrot.slane %v555, 1
      %v557 = vadd.f32 %v555, %v556
      %v558 = vmul.f32 %v548, 0.03125
      %v559 = vmul.f32 %v557, 0.03125
      %v560 = vmax.f32 %v532, %v536
      %v561 = vmax.f32 %v534, %v538
      %v562 = vmax.f32 %v560, %v561
      %v563 = vrot.slane %v562, 4
      %v564 = vmax.f32 %v562, %v563
      %v565 = vrot.slane %v564, 2
      %v566 = vmax.f32 %v564, %v565
      %v567 = vrot.slane %v566, 1
      %v568 = vmax.f32 %v566, %v567
      %v569 = vmax.f32 %v533, %v537
      %v570 = vmax.f32 %v535, %v539
      %v571 = vmax.f32 %v569, %v570
      %v572 = vrot.slane %v571, 4
      %v573 = vmax.f32 %v571, %v572
      %v574 = vrot.slane %v573, 2
      %v575 = vmax.f32 %v573, %v574
      %v576 = vrot.slane %v575, 1
      %v577 = vmax.f32 %v575, %v576
      %v578 = vld [vmem:[%s3] sm:$0xff]
      %v579 = vld [vmem:[%s3 + $0x8] sm:$0xff]
      %v580 = vld [vmem:[%s3 + $0x10] sm:$0xff]
      %v581 = vld [vmem:[%s3 + $0x18] sm:$0xff]
      %v582 = vld [vmem:[%s3 + $0x20] sm:$0xff]
      %v583 = vld [vmem:[%s3 + $0x28] sm:$0xff]
      %v584 = vld [vmem:[%s3 + $0x30] sm:$0xff]
      %v585 = vld [vmem:[%s3 + $0x38] sm:$0xff]
      %v586 = vld [vmem:[%s3 + $0x40] sm:$0xff]
      %v587 = vld [vmem:[%s3 + $0x48] sm:$0xff]
      %v588 = vld [vmem:[%s3 + $0x50] sm:$0xff]
      %v589 = vld [vmem:[%s3 + $0x58] sm:$0xff]
      %v590 = vld [vmem:[%s3 + $0x60] sm:$0xff]
      %v591 = vld [vmem:[%s3 + $0x68] sm:$0xff]
      %v592 = vld [vmem:[%s3 + $0x70] sm:$0xff]
      %v593 = vld [vmem:[%s3 + $0x78] sm:$0xff]
      %v594 = vld [vmem:[%s3 + $0x80] sm:$0xff]
      %v595 = vld [vmem:[%s3 + $0x88] sm:$0xff]
      %v596 = vld [vmem:[%s3 + $0x90] sm:$0xff]
      %v597 = vld [vmem:[%s3 + $0x98] sm:$0xff]
      %v598 = vld [vmem:[%s3 + $0xa0] sm:$0xff]
      %v599 = vld [vmem:[%s3 + $0xa8] sm:$0xff]
      %v600 = vld [vmem:[%s3 + $0xb0] sm:$0xff]
      %v601 = vld [vmem:[%s3 + $0xb8] sm:$0xff]
      %v602 = vld [vmem:[%s3 + $0xc0] sm:$0xff]
      %v603 = vld [vmem:[%s3 + $0xc8] sm:$0xff]
      %v604 = vld [vmem:[%s3 + $0xd0] sm:$0xff]
      %v605 = vld [vmem:[%s3 + $0xd8] sm:$0xff]
      %v606 = vld [vmem:[%s3 + $0xe0] sm:$0xff]
      %v607 = vld [vmem:[%s3 + $0xe8] sm:$0xff]
      %v608 = vld [vmem:[%s3 + $0xf0] sm:$0xff]
      %v609 = vld [vmem:[%s3 + $0xf8] sm:$0xff]
      %v610 = vld [vmem:[%s3 + $0x100] sm:$0xff]
      %v611 = vld [vmem:[%s3 + $0x108] sm:$0xff]
      %v612 = vld [vmem:[%s3 + $0x110] sm:$0xff]
      %v613 = vld [vmem:[%s3 + $0x118] sm:$0xff]
      %v614 = vld [vmem:[%s3 + $0x120] sm:$0xff]
      %v615 = vld [vmem:[%s3 + $0x128] sm:$0xff]
      %v616 = vld [vmem:[%s3 + $0x130] sm:$0xff]
      %v617 = vld [vmem:[%s3 + $0x138] sm:$0xff]
      %v618 = vld [vmem:[%s3 + $0x140] sm:$0xff]
      %v619 = vld [vmem:[%s3 + $0x148] sm:$0xff]
      %v620 = vld [vmem:[%s3 + $0x150] sm:$0xff]
      %v621 = vld [vmem:[%s3 + $0x158] sm:$0xff]
      %v622 = vld [vmem:[%s3 + $0x160] sm:$0xff]
      %v623 = vld [vmem:[%s3 + $0x168] sm:$0xff]
      %v624 = vld [vmem:[%s3 + $0x170] sm:$0xff]
      %v625 = vld [vmem:[%s3 + $0x178] sm:$0xff]
      %v626 = vld [vmem:[%s3 + $0x180] sm:$0xff]
      %v627 = vld [vmem:[%s3 + $0x188] sm:$0xff]
      %v628 = vld [vmem:[%s3 + $0x190] sm:$0xff]
      %v629 = vld [vmem:[%s3 + $0x198] sm:$0xff]
      %v630 = vld [vmem:[%s3 + $0x1a0] sm:$0xff]
      %v631 = vld [vmem:[%s3 + $0x1a8] sm:$0xff]
      %v632 = vld [vmem:[%s3 + $0x1b0] sm:$0xff]
      %v633 = vld [vmem:[%s3 + $0x1b8] sm:$0xff]
      %v634 = vld [vmem:[%s3 + $0x1c0] sm:$0xff]
      %v635 = vld [vmem:[%s3 + $0x1c8] sm:$0xff]
      %v636 = vld [vmem:[%s3 + $0x1d0] sm:$0xff]
      %v637 = vld [vmem:[%s3 + $0x1d8] sm:$0xff]
      %v638 = vld [vmem:[%s3 + $0x1e0] sm:$0xff]
      %v639 = vld [vmem:[%s3 + $0x1e8] sm:$0xff]
      %v640 = vld [vmem:[%s3 + $0x1f0] sm:$0xff]
      %v641 = vld [vmem:[%s3 + $0x1f8] sm:$0xff]
      %v642 = vld [vmem:[%s3 + $0x200] sm:$0xff]
      %v643 = vld [vmem:[%s3 + $0x208] sm:$0xff]
      %v644 = vld [vmem:[%s3 + $0x210] sm:$0xff]
      %v645 = vld [vmem:[%s3 + $0x218] sm:$0xff]
      %v646 = vld [vmem:[%s3 + $0x220] sm:$0xff]
      %v647 = vld [vmem:[%s3 + $0x228] sm:$0xff]
      %v648 = vld [vmem:[%s3 + $0x230] sm:$0xff]
      %v649 = vld [vmem:[%s3 + $0x238] sm:$0xff]
      %v650 = vld [vmem:[%s3 + $0x240] sm:$0xff]
      %v651 = vld [vmem:[%s3 + $0x248] sm:$0xff]
      %v652 = vld [vmem:[%s3 + $0x250] sm:$0xff]
      %v653 = vld [vmem:[%s3 + $0x258] sm:$0xff]
      %v654 = vld [vmem:[%s3 + $0x260] sm:$0xff]
      %v655 = vld [vmem:[%s3 + $0x268] sm:$0xff]
      %v656 = vld [vmem:[%s3 + $0x270] sm:$0xff]
      %v657 = vld [vmem:[%s3 + $0x278] sm:$0xff]
      %v658 = vld [vmem:[%s3 + $0x280] sm:$0xff]
      %v659 = vld [vmem:[%s3 + $0x288] sm:$0xff]
      %v660 = vld [vmem:[%s3 + $0x290] sm:$0xff]
      %v661 = vld [vmem:[%s3 + $0x298] sm:$0xff]
      %v662 = vld [vmem:[%s3 + $0x2a0] sm:$0xff]
      %v663 = vld [vmem:[%s3 + $0x2a8] sm:$0xff]
      %v664 = vld [vmem:[%s3 + $0x2b0] sm:$0xff]
      %v665 = vld [vmem:[%s3 + $0x2b8] sm:$0xff]
      %v666 = vld [vmem:[%s3 + $0x2c0] sm:$0xff]
      %v667 = vld [vmem:[%s3 + $0x2c8] sm:$0xff]
      %v668 = vld [vmem:[%s3 + $0x2d0] sm:$0xff]
      %v669 = vld [vmem:[%s3 + $0x2d8] sm:$0xff]
      %v670 = vld [vmem:[%s3 + $0x2e0] sm:$0xff]
      %v671 = vld [vmem:[%s3 + $0x2e8] sm:$0xff]
      %v672 = vld [vmem:[%s3 + $0x2f0] sm:$0xff]
      %v673 = vld [vmem:[%s3 + $0x2f8] sm:$0xff]
      %v674 = vld [vmem:[%s3 + $0x300] sm:$0xff]
      %v675 = vld [vmem:[%s3 + $0x308] sm:$0xff]
      %v676 = vld [vmem:[%s3 + $0x310] sm:$0xff]
      %v677 = vld [vmem:[%s3 + $0x318] sm:$0xff]
      %v678 = vld [vmem:[%s3 + $0x320] sm:$0xff]
      %v679 = vld [vmem:[%s3 + $0x328] sm:$0xff]
      %v680 = vld [vmem:[%s3 + $0x330] sm:$0xff]
      %v681 = vld [vmem:[%s3 + $0x338] sm:$0xff]
      %v682 = vld [vmem:[%s3 + $0x340] sm:$0xff]
      %v683 = vld [vmem:[%s3 + $0x348] sm:$0xff]
      %v684 = vld [vmem:[%s3 + $0x350] sm:$0xff]
      %v685 = vld [vmem:[%s3 + $0x358] sm:$0xff]
      %v686 = vld [vmem:[%s3 + $0x360] sm:$0xff]
      %v687 = vld [vmem:[%s3 + $0x368] sm:$0xff]
      %v688 = vld [vmem:[%s3 + $0x370] sm:$0xff]
      %v689 = vld [vmem:[%s3 + $0x378] sm:$0xff]
      %v690 = vld [vmem:[%s3 + $0x380] sm:$0xff]
      %v691 = vld [vmem:[%s3 + $0x388] sm:$0xff]
      %v692 = vld [vmem:[%s3 + $0x390] sm:$0xff]
      %v693 = vld [vmem:[%s3 + $0x398] sm:$0xff]
      %v694 = vld [vmem:[%s3 + $0x3a0] sm:$0xff]
      %v695 = vld [vmem:[%s3 + $0x3a8] sm:$0xff]
      %v696 = vld [vmem:[%s3 + $0x3b0] sm:$0xff]
      %v697 = vld [vmem:[%s3 + $0x3b8] sm:$0xff]
      %v698 = vld [vmem:[%s3 + $0x3c0] sm:$0xff]
      %v699 = vld [vmem:[%s3 + $0x3c8] sm:$0xff]
      %v700 = vld [vmem:[%s3 + $0x3d0] sm:$0xff]
      %v701 = vld [vmem:[%s3 + $0x3d8] sm:$0xff]
      %v702 = vld [vmem:[%s3 + $0x3e0] sm:$0xff]
      %v703 = vld [vmem:[%s3 + $0x3e8] sm:$0xff]
      %v704 = vld [vmem:[%s3 + $0x3f0] sm:$0xff]
      %v705 = vld [vmem:[%s3 + $0x3f8] sm:$0xff]
      %706 = vmatprep.subr.mxu0 %v609
      %707 = vmatpush1.msra.mxu0 %v608
      %708 = vmatprep.subr.mxu0 %v607
      %709 = vmatpush1.msra.mxu0 %v606
      %710 = vmatprep.subr.mxu0 %v605
      %711 = vmatpush1.msra.mxu0 %v604
      %712 = vmatprep.subr.mxu0 %v603
      %713 = vmatpush1.msra.mxu0 %v602
      %714 = vmatprep.subr.mxu0 %v601
      %715 = vmatpush1.msra.mxu0 %v600
      %716 = vmatprep.subr.mxu0 %v599
      %717 = vmatpush1.msra.mxu0 %v598
      %718 = vmatprep.subr.mxu0 %v597
      %719 = vmatpush1.msra.mxu0 %v596
      %720 = vmatprep.subr.mxu0 %v595
      %721 = vmatpush1.msra.mxu0 %v594
      %722 = vmatprep.subr.mxu0 %v593
      %723 = vmatpush1.msra.mxu0 %v592
      %724 = vmatprep.subr.mxu0 %v591
      %725 = vmatpush1.msra.mxu0 %v590
      %726 = vmatprep.subr.mxu0 %v589
      %727 = vmatpush1.msra.mxu0 %v588
      %728 = vmatprep.subr.mxu0 %v587
      %729 = vmatpush1.msra.mxu0 %v586
      %730 = vmatprep.subr.mxu0 %v585
      %731 = vmatpush1.msra.mxu0 %v584
      %732 = vmatprep.subr.mxu0 %v583
      %733 = vmatpush1.msra.mxu0 %v582
      %734 = vmatprep.subr.mxu0 %v581
      %735 = vmatpush1.msra.mxu0 %v580
      %736 = vmatprep.subr.mxu0 %v579
      %737 = vmatpush1.msra.mxu0 %v578
      %738 = vmatprep.subr.mxu0 %v641
      %739 = vmatpush2.msra.mxu0 %v640
      %740 = vmatprep.subr.mxu0 %v639
      %741 = vmatpush2.msra.mxu0 %v638
      %742 = vmatprep.subr.mxu0 %v637
      %743 = vmatpush2.msra.mxu0 %v636
      %744 = vmatprep.subr.mxu0 %v635
      %745 = vmatpush2.msra.mxu0 %v634
      %746 = vmatprep.subr.mxu0 %v633
      %747 = vmatpush2.msra.mxu0 %v632
      %748 = vmatprep.subr.mxu0 %v631
      %749 = vmatpush2.msra.mxu0 %v630
      %750 = vmatprep.subr.mxu0 %v629
      %751 = vmatpush2.msra.mxu0 %v628
      %752 = vmatprep.subr.mxu0 %v627
      %753 = vmatpush2.msra.mxu0 %v626
      %754 = vmatprep.subr.mxu0 %v625
      %755 = vmatpush2.msra.mxu0 %v624
      %756 = vmatprep.subr.mxu0 %v623
      %757 = vmatpush2.msra.mxu0 %v622
      %758 = vmatprep.subr.mxu0 %v621
      %759 = vmatpush2.msra.mxu0 %v620
      %760 = vmatprep.subr.mxu0 %v619
      %761 = vmatpush2.msra.mxu0 %v618
      %762 = vmatprep.subr.mxu0 %v617
      %763 = vmatpush2.msra.mxu0 %v616
      %764 = vmatprep.subr.mxu0 %v615
      %765 = vmatpush2.msra.mxu0 %v614
      %766 = vmatprep.subr.mxu0 %v613
      %767 = vmatpush2.msra.mxu0 %v612
      %768 = vmatprep.subr.mxu0 %v611
      %769 = vmatpush2.msra.mxu0 %v610
      %770 = vmatprep.mubr.f32.mxu0 %v559
      %771 = vmatmul.mubr.f32.gmra.mxu0 %v558
      %v772 = vpop.f32.mrf.mxu0
      %v773 = vadd.f32 0.0, %v772
      %v774 = vpop.f32.mrf.mxu0
      %v775 = vadd.f32 0.0, %v774
      %776 = vdwg.mxu0
      %777 = vmatprep.subr.mxu0 %v673
      %778 = vmatpush1.msra.mxu0 %v672
      %779 = vmatprep.subr.mxu0 %v671
      %780 = vmatpush1.msra.mxu0 %v670
      %781 = vmatprep.subr.mxu0 %v669
      %782 = vmatpush1.msra.mxu0 %v668
      %783 = vmatprep.subr.mxu0 %v667
      %784 = vmatpush1.msra.mxu0 %v666
      %785 = vmatprep.subr.mxu0 %v665
      %786 = vmatpush1.msra.mxu0 %v664
      %787 = vmatprep.subr.mxu0 %v663
      %788 = vmatpush1.msra.mxu0 %v662
      %789 = vmatprep.subr.mxu0 %v661
      %790 = vmatpush1.msra.mxu0 %v660
      %791 = vmatprep.subr.mxu0 %v659
      %792 = vmatpush1.msra.mxu0 %v658
      %793 = vmatprep.subr.mxu0 %v657
      %794 = vmatpush1.msra.mxu0 %v656
      %795 = vmatprep.subr.mxu0 %v655
      %796 = vmatpush1.msra.mxu0 %v654
      %797 = vmatprep.subr.mxu0 %v653
      %798 = vmatpush1.msra.mxu0 %v652
      %799 = vmatprep.subr.mxu0 %v651
      %800 = vmatpush1.msra.mxu0 %v650
      %801 = vmatprep.subr.mxu0 %v649
      %802 = vmatpush1.msra.mxu0 %v648
      %803 = vmatprep.subr.mxu0 %v647
      %804 = vmatpush1.msra.mxu0 %v646
      %805 = vmatprep.subr.mxu0 %v645
      %806 = vmatpush1.msra.mxu0 %v644
      %807 = vmatprep.subr.mxu0 %v643
      %808 = vmatpush1.msra.mxu0 %v642
      %809 = vmatprep.subr.mxu0 %v705
      %810 = vmatpush2.msra.mxu0 %v704
      %811 = vmatprep.subr.mxu0 %v703
      %812 = vmatpush2.msra.mxu0 %v702
      %813 = vmatprep.subr.mxu0 %v701
      %814 = vmatpush2.msra.mxu0 %v700
      %815 = vmatprep.subr.mxu0 %v699
      %816 = vmatpush2.msra.mxu0 %v698
      %817 = vmatprep.subr.mxu0 %v697
      %818 = vmatpush2.msra.mxu0 %v696
      %819 = vmatprep.subr.mxu0 %v695
      %820 = vmatpush2.msra.mxu0 %v694
      %821 = vmatprep.subr.mxu0 %v693
      %822 = vmatpush2.msra.mxu0 %v692
      %823 = vmatprep.subr.mxu0 %v691
      %824 = vmatpush2.msra.mxu0 %v690
      %825 = vmatprep.subr.mxu0 %v689
      %826 = vmatpush2.msra.mxu0 %v688
      %827 = vmatprep.subr.mxu0 %v687
      %828 = vmatpush2.msra.mxu0 %v686
      %829 = vmatprep.subr.mxu0 %v685
      %830 = vmatpush2.msra.mxu0 %v684
      %831 = vmatprep.subr.mxu0 %v683
      %832 = vmatpush2.msra.mxu0 %v682
      %833 = vmatprep.subr.mxu0 %v681
      %834 = vmatpush2.msra.mxu0 %v680
      %835 = vmatprep.subr.mxu0 %v679
      %836 = vmatpush2.msra.mxu0 %v678
      %837 = vmatprep.subr.mxu0 %v677
      %838 = vmatpush2.msra.mxu0 %v676
      %839 = vmatprep.subr.mxu0 %v675
      %840 = vmatpush2.msra.mxu0 %v674
      %841 = vmatprep.mubr.f32.mxu0 %v577
      %842 = vmatmul.mubr.f32.gmra.mxu0 %v568
      %v843 = vpop.f32.mrf.mxu0
      %v844 = vadd.f32 %v773, %v843
      %v845 = vpop.f32.mrf.mxu0
      %v846 = vadd.f32 %v775, %v845
      %847 = vdwg.mxu0
      %v848 = vxor.u32 %v844, 2147483648
      %v849 = vxor.u32 %v846, 2147483648
      %v850 = vmul.f32 %v848, 1.442695
      %v851 = vpow.pop %v850
      %v852 = vmul.f32 %v849, 1.442695
      %v853 = vpow.pop %v852
      %v854 = vadd.f32 %v851, 1.0
      %v855 = vadd.f32 %v853, 1.0
      %v856 = vrcp.pop %v854
      %v857 = vmul.f32 1.0, %v856
      %v858 = vrcp.pop %v855
      %v859 = vmul.f32 1.0, %v858
      %v860 = vlaneseq
      %v861 = vshrl.u32 %v860, 7
      %v862 = vsub.s32 0, %v861
      %v863 = vrot.slane %v857, %v862
      %v864 = vlaneseq
      %v865 = vshrl.u32 %v864, 7
      %v866 = vsub.s32 0, %v865
      %v867 = vrot.slane %v859, %v866
      %v868 = vmul.f32 %v532, %v863
      %v869 = vmul.f32 %v533, %v867
      %v870 = vmul.f32 %v534, %v863
      %v871 = vmul.f32 %v535, %v867
      %v872 = vmul.f32 %v536, %v863
      %v873 = vmul.f32 %v537, %v867
      %v874 = vmul.f32 %v538, %v863
      %v875 = vmul.f32 %v539, %v867
      %876 = vst [vmem:[%s197] sm:$0xff] %v868
      %877 = vst [vmem:[%s197 + $0x8] sm:$0xff] %v869
      %878 = vst [vmem:[%s197 + $0x10] sm:$0xff] %v870
      %879 = vst [vmem:[%s197 + $0x18] sm:$0xff] %v871
      %880 = vst [vmem:[%s197 + $0x20] sm:$0xff] %v872
      %881 = vst [vmem:[%s197 + $0x28] sm:$0xff] %v873
      %882 = vst [vmem:[%s197 + $0x30] sm:$0xff] %v874
      %883 = vst [vmem:[%s197 + $0x38] sm:$0xff] %v875
      %p884 = scmp.lt.s32.totalorder %s15, 1
      %s885 = scalar_select %p884, %s15, 1
      %s886 = smul.addr %s885, 8
      %s887 = smul.addr %s886, 8
      %s888 = scalar_lea.vmem %s4, %s887
      // Predicated region
      $region37: #{cbam_pallas.1} parent=35 // pred_check
        %p889 = pneg %p122
      $region38: #{cbam_pallas.1} parent=35 // pred_check_branch
        %891 = sbr.rel (%p889) target = $region40
      $region39: #{cbam_pallas.1} parent=35 // pred_region
        _
      $region40: #{cbam_pallas.1} parent=35 // pred_fallthru
        _
    $region36: #{cbam_pallas.1} parent=5 // pred_fallthru
      _
    %p892 = scmp.le.s32.totalorder 2, %s10
    // Predicated region
    $region41: #{cbam_pallas.1} parent=5 // pred_check
      %p893 = pneg %p892
    $region42: #{cbam_pallas.1} parent=5 // pred_check_branch
      %895 = sbr.rel (%p893) target = $region44
    $region43: #{cbam_pallas.1} parent=5 // pred_region
      %s896 = ssub.s32 %s10, 2
      // Predicated region
      $region45: #{cbam_pallas.1} parent=43 // pred_check
        %p897 = pneg %p128
      $region46: #{cbam_pallas.1} parent=43 // pred_check_branch
        %899 = sbr.rel (%p897) target = $region48
      $region47: #{cbam_pallas.1} parent=43 // pred_region
        %p900 = scmp.lt.s32.totalorder %s16, 1
        %s901 = scalar_select %p900, %s16, 1
        %s902 = smul.addr %s901, 8
        %s903 = smul.addr %s902, 8
        %s904 = scalar_lea.vmem %s4, %s903
      $region48: #{cbam_pallas.1} parent=43 // pred_fallthru
        _
    $region44: #{cbam_pallas.1} parent=5 // pred_fallthru
      _
  $region6: #{cbam_pallas.1} parent=0 // loop_footer
    %s14 = sadd.s32 1, %s10
  $region7: #{cbam_pallas.1} parent=0 // loop_footer_branch
    %9 = sbr.rel target = $region3
  $region8: #{cbam_pallas.1} parent=0 // loop_exit
    _

</llo_original>
